<compile_context>
chip_gen: v6e
topology: v6e:2x2x1
jax: 0.10.0
libtpu: 0.0.40
codegen_flags: <defaults>
</compile_context>

<pallas_src>
import jax
import jax.numpy as jnp
from jax.experimental import pallas as pl
from jax.experimental.pallas import tpu as pltpu


def mlp_kernel(x_ref,
               w1_ref, b1_ref, w2_ref, b2_ref, w3_ref, b3_ref,
               w4_ref, b4_ref, w5_ref, b5_ref, w6_ref, b6_ref,
               o_ref):
    cdt = w1_ref.dtype  # MXU input dtype (bf16 default, f32 opt-in)

    # fc1 (batch-major): [TB, 92] @ [92, 128] -> [TB, 128]; Mosaic pads K=92.
    x = x_ref[...].astype(cdt)
    h1 = jnp.dot(x, w1_ref[...], preferred_element_type=jnp.float32) + b1_ref[...]
    h1 = jax.nn.sigmoid(h1)

    # fc2 flips to feature-major via the q@k.T pattern: contract w2[64,128]
    # with h1[TB,128] over the 128-dim -> [64, TB].  Batch lives in lanes from
    # here on, so the narrow layers use the MXU's full N width and the final
    # store is lane-dense.
    h2 = jax.lax.dot_general(
        w2_ref[...], h1.astype(cdt), (((1,), (1,)), ((), ())),
        preferred_element_type=jnp.float32) + b2_ref[...]
    h2 = jax.nn.sigmoid(h2)

    def dense_fm(h, w_ref, b_ref):
        # [n_out, n_in] @ [n_in, TB] -> [n_out, TB]; f32 accumulate + f32 bias.
        return jnp.dot(w_ref[...], h.astype(cdt),
                       preferred_element_type=jnp.float32) + b_ref[...]

    h3 = jnp.maximum(dense_fm(h2, w3_ref, b3_ref), 0.0)   # [32, TB]
    h4 = jnp.maximum(dense_fm(h3, w4_ref, b4_ref), 0.0)   # [16, TB]
    h5 = jnp.maximum(dense_fm(h4, w5_ref, b5_ref), 0.0)   # [8,  TB]

    # fc6 (8 -> 1) on the VPU/XLU: weight-column multiply + 8-sublane reduce.
    out = jnp.sum(h5 * w6_ref[...], axis=0, keepdims=True) + b6_ref[...]  # [1, TB]

    o_ref[...] = out[None].astype(o_ref.dtype)             # (1, 1, TB) block


def _round_up(n, m):
    return ((n + m - 1) // m) * m


def linnernetworker_forward(x, params, *, block_b=2048, weights_dtype=jnp.bfloat16):
    """x: [B, 92] f32. params: weights stored [in, out], biases [1, out].

    block_b: max batch rows per grid step (2048-4096 amortizes the ~0.35us
    per-step cost; working set is ~2 KiB/row so 2048 fits v5e's scoped VMEM
    with the 32 MiB limit below).  weights_dtype: bf16 (default) keeps weights
    + in-kernel activation casts in bf16 for ~3x fewer MXU passes; pass
    jnp.float32 for full-precision matmuls.
    """
    B, F = x.shape
    assert F == 92

    # Batch tile: multiple of 128 so the feature-major intermediates/output
    # are lane-dense.
    TB = _round_up(min(block_b, _round_up(B, 128)), 128)
    # v7x megacore: keep >= 2 grid steps when the batch allows it (a 1-step
    # grid runs on one TensorCore).  No effect on v5e/v6e.
    if _round_up(B, TB) // TB < 2 and TB % 256 == 0:
        TB //= 2
    B_pad = _round_up(B, TB)

    # Only the ragged remainder (if any) is padded; x itself is passed
    # unpadded/uncast.  For large B prefer B % TB == 0 to avoid this copy.
    x_p = x if B_pad == B else jnp.pad(x, ((0, B_pad - B), (0, 0)))

    wdt = weights_dtype
    args = (
        x_p,
        params["w1"].astype(wdt), params["b1"],              # [92,128], [1,128]
        params["w2"].T.astype(wdt), params["b2"].T,          # [64,128], [64,1]
        params["w3"].T.astype(wdt), params["b3"].T,          # [32, 64], [32,1]
        params["w4"].T.astype(wdt), params["b4"].T,          # [16, 32], [16,1]
        params["w5"].T.astype(wdt), params["b5"].T,          # [ 8, 16], [ 8,1]
        params["w6"].astype(jnp.float32), params["b6"],      # [ 8,  1], [ 1,1]
    )

    def _resident(a):
        # Constant block index: fetched once, stays resident in VMEM across
        # grid steps (Pallas skips the re-DMA when the block index repeats).
        return pl.BlockSpec(a.shape, lambda i: (0, 0))

    in_specs = [pl.BlockSpec((TB, F), lambda i: (i, 0))]
    in_specs += [_resident(a) for a in args[1:]]
    out_spec = pl.BlockSpec((1, 1, TB), lambda i: (i, 0, 0))

    # Honest (unpadded-F) cost hint for XLA's scheduler.
    layer_dims = [(92, 128), (128, 64), (64, 32), (32, 16), (16, 8), (8, 1)]
    flops = 2 * B_pad * sum(fi * fo for fi, fo in layer_dims)
    transcendentals = B_pad * (128 + 64)   # the two sigmoid layers
    bytes_accessed = (int(x_p.size) * x_p.dtype.itemsize
                      + sum(int(a.size) * a.dtype.itemsize for a in args[1:])
                      + B_pad * 4)

    out = pl.pallas_call(
        mlp_kernel,
        out_shape=jax.ShapeDtypeStruct((B_pad // TB, 1, TB), jnp.float32),
        grid=(B_pad // TB,),
        in_specs=in_specs,
        out_specs=out_spec,
        compiler_params=pltpu.CompilerParams(
            dimension_semantics=("parallel",),          # megacore on v7x
            vmem_limit_bytes=32 * 1024 * 1024),         # v5e default is 16 MiB
        cost_estimate=pl.CostEstimate(
            flops=int(flops),
            transcendentals=int(transcendentals),
            bytes_accessed=int(bytes_accessed)),
    )(*args)

    return out.reshape(-1)[:B].reshape(B, 1)


def init_params(key):
    """Deterministic init matching the PyTorch layer shapes.
    PyTorch nn.Linear(in, out) has weight [out, in]; we store transposed [in, out]."""
    dims = [(92, 128), (128, 64), (64, 32), (32, 16), (16, 8), (8, 1)]
    params = {}
    for i, (fan_in, fan_out) in enumerate(dims, start=1):
        key, kw, kb = jax.random.split(key, 3)
        bound = 1.0 / jnp.sqrt(fan_in)
        params[f"w{i}"] = jax.random.uniform(
            kw, (fan_in, fan_out), jnp.float32, -bound, bound)
        params[f"b{i}"] = jax.random.uniform(
            kb, (1, fan_out), jnp.float32, -bound, bound)
    return params


def reference_forward(x, params):
    h = jax.nn.sigmoid(x @ params["w1"] + params["b1"])
    h = jax.nn.sigmoid(h @ params["w2"] + params["b2"])
    h = jnp.maximum(h @ params["w3"] + params["b3"], 0.0)
    h = jnp.maximum(h @ params["w4"] + params["b4"], 0.0)
    h = jnp.maximum(h @ params["w5"] + params["b5"], 0.0)
    return h @ params["w6"] + params["b6"]


if __name__ == "__main__":
    key = jax.random.PRNGKey(0)
    key, kx = jax.random.split(key)
    params = init_params(key)

    # 1) Small batch, f32-weight path: validates semantics vs the pure-JAX
    #    reference with a tight tolerance.
    B = 8
    x = jax.random.normal(kx, (B, 92), jnp.float32)
    out = jax.block_until_ready(
        linnernetworker_forward(x, params, weights_dtype=jnp.float32))
    ref = reference_forward(x, params)
    assert out.shape == (B, 1)
    assert jnp.allclose(out, ref, atol=1e-4, rtol=1e-4)

    # 2) Larger batch, default bf16-weight MXU path; TB auto-splits to 256 so
    #    the 2-step grid exercises the x-tile pipeline (and v7x megacore).
    B2 = 512
    key, kx2 = jax.random.split(key)
    x2 = jax.random.normal(kx2, (B2, 92), jnp.float32)
    out2 = jax.block_until_ready(linnernetworker_forward(x2, params))
    ref2 = reference_forward(x2, params)
    assert out2.shape == (B2, 1)
    assert jnp.allclose(out2, ref2, atol=5e-2, rtol=5e-2)

    print("KERNEL_OK")
</pallas_src>

<mosaic_0001>
module attributes {stable_mosaic.version = 11 : i64} {
  func.func @mlp_kernel(%arg0: i32, %arg1: memref<128x92xf32, #tpu.memory_space<vmem>>, %arg2: memref<92x128xf32, #tpu.memory_space<vmem>>, %arg3: memref<1x128xf32, #tpu.memory_space<vmem>>, %arg4: memref<64x128xf32, #tpu.memory_space<vmem>>, %arg5: memref<64x1xf32, #tpu.memory_space<vmem>>, %arg6: memref<32x64xf32, #tpu.memory_space<vmem>>, %arg7: memref<32x1xf32, #tpu.memory_space<vmem>>, %arg8: memref<16x32xf32, #tpu.memory_space<vmem>>, %arg9: memref<16x1xf32, #tpu.memory_space<vmem>>, %arg10: memref<8x16xf32, #tpu.memory_space<vmem>>, %arg11: memref<8x1xf32, #tpu.memory_space<vmem>>, %arg12: memref<8x1xf32, #tpu.memory_space<vmem>>, %arg13: memref<1x1xf32, #tpu.memory_space<vmem>>, %arg14: memref<1x1x128xf32, #tpu.memory_space<vmem>>) attributes {dimension_semantics = [#tpu.dimension_semantics<parallel>], iteration_bounds = array<i64: 1>, scalar_prefetch = 0 : i64, scratch_operands = 0 : i64, tpu.core_type = #tpu.core_type<tc>, window_params = [{transform_indices = @transform_0, window_bounds = array<i64: 128, 92>}, {pipeline_mode = #tpu.pipeline_mode<synchronous>, transform_indices = @transform_1, window_bounds = array<i64: 92, 128>}, {pipeline_mode = #tpu.pipeline_mode<synchronous>, transform_indices = @transform_2, window_bounds = array<i64: 1, 128>}, {pipeline_mode = #tpu.pipeline_mode<synchronous>, transform_indices = @transform_3, window_bounds = array<i64: 64, 128>}, {pipeline_mode = #tpu.pipeline_mode<synchronous>, transform_indices = @transform_4, window_bounds = array<i64: 64, 1>}, {pipeline_mode = #tpu.pipeline_mode<synchronous>, transform_indices = @transform_5, window_bounds = array<i64: 32, 64>}, {pipeline_mode = #tpu.pipeline_mode<synchronous>, transform_indices = @transform_6, window_bounds = array<i64: 32, 1>}, {pipeline_mode = #tpu.pipeline_mode<synchronous>, transform_indices = @transform_7, window_bounds = array<i64: 16, 32>}, {pipeline_mode = #tpu.pipeline_mode<synchronous>, transform_indices = @transform_8, window_bounds = array<i64: 16, 1>}, {pipeline_mode = #tpu.pipeline_mode<synchronous>, transform_indices = @transform_9, window_bounds = array<i64: 8, 16>}, {pipeline_mode = #tpu.pipeline_mode<synchronous>, transform_indices = @transform_10, window_bounds = array<i64: 8, 1>}, {pipeline_mode = #tpu.pipeline_mode<synchronous>, transform_indices = @transform_11, window_bounds = array<i64: 8, 1>}, {pipeline_mode = #tpu.pipeline_mode<synchronous>, transform_indices = @transform_12, window_bounds = array<i64: 1, 1>}, {transform_indices = @transform_13, window_bounds = array<i64: 1, 1, 128>}]} {
    %c0 = arith.constant 0 : index
    %c0_0 = arith.constant 0 : index
    %0 = vector.load %arg1[%c0, %c0_0] : memref<128x92xf32, #tpu.memory_space<vmem>>, vector<128x92xf32>
    %c0_1 = arith.constant 0 : index
    %c0_2 = arith.constant 0 : index
    %1 = vector.load %arg2[%c0_1, %c0_2] : memref<92x128xf32, #tpu.memory_space<vmem>>, vector<92x128xf32>
    %cst = arith.constant dense<0.000000e+00> : vector<128x128xf32>
    %2 = tpu.matmul %0, %1, %cst {dimension_numbers = #tpu.dot_dimension_numbers<[1], [0], [0], [1], [0, 0, 1, 1], [], []>} : vector<128x92xf32>, vector<92x128xf32>, vector<128x128xf32> -> vector<128x128xf32>
    %c0_3 = arith.constant 0 : index
    %c0_4 = arith.constant 0 : index
    %3 = vector.load %arg3[%c0_3, %c0_4] : memref<1x128xf32, #tpu.memory_space<vmem>>, vector<1x128xf32>
    %4 = vector.broadcast %3 : vector<1x128xf32> to vector<128x128xf32>
    %5 = arith.addf %2, %4 : vector<128x128xf32>
    %6 = arith.negf %5 : vector<128x128xf32>
    %7 = math.exp %6 : vector<128x128xf32>
    %cst_5 = arith.constant 1.000000e+00 : f32
    %8 = vector.broadcast %cst_5 : f32 to vector<128x128xf32>
    %9 = arith.addf %8, %7 : vector<128x128xf32>
    %10 = arith.divf %8, %9 : vector<128x128xf32>
    %c0_6 = arith.constant 0 : index
    %c0_7 = arith.constant 0 : index
    %11 = vector.load %arg4[%c0_6, %c0_7] : memref<64x128xf32, #tpu.memory_space<vmem>>, vector<64x128xf32>
    %cst_8 = arith.constant dense<0.000000e+00> : vector<64x128xf32>
    %12 = tpu.matmul %11, %10, %cst_8 {dimension_numbers = #tpu.dot_dimension_numbers<[1], [1], [0], [0], [0, 0, 1, 0], [], []>} : vector<64x128xf32>, vector<128x128xf32>, vector<64x128xf32> -> vector<64x128xf32>
    %c0_9 = arith.constant 0 : index
    %c0_10 = arith.constant 0 : index
    %13 = vector.load %arg5[%c0_9, %c0_10] : memref<64x1xf32, #tpu.memory_space<vmem>>, vector<64x1xf32>
    %14 = vector.broadcast %13 : vector<64x1xf32> to vector<64x128xf32>
    %15 = arith.addf %12, %14 : vector<64x128xf32>
    %16 = arith.negf %15 : vector<64x128xf32>
    %17 = math.exp %16 : vector<64x128xf32>
    %cst_11 = arith.constant 1.000000e+00 : f32
    %18 = vector.broadcast %cst_11 : f32 to vector<64x128xf32>
    %19 = arith.addf %18, %17 : vector<64x128xf32>
    %20 = arith.divf %18, %19 : vector<64x128xf32>
    %c0_12 = arith.constant 0 : index
    %c0_13 = arith.constant 0 : index
    %21 = vector.load %arg6[%c0_12, %c0_13] : memref<32x64xf32, #tpu.memory_space<vmem>>, vector<32x64xf32>
    %cst_14 = arith.constant dense<0.000000e+00> : vector<32x128xf32>
    %22 = tpu.matmul %21, %20, %cst_14 {dimension_numbers = #tpu.dot_dimension_numbers<[1], [0], [0], [1], [0, 0, 1, 1], [], []>} : vector<32x64xf32>, vector<64x128xf32>, vector<32x128xf32> -> vector<32x128xf32>
    %c0_15 = arith.constant 0 : index
    %c0_16 = arith.constant 0 : index
    %23 = vector.load %arg7[%c0_15, %c0_16] : memref<32x1xf32, #tpu.memory_space<vmem>>, vector<32x1xf32>
    %24 = vector.broadcast %23 : vector<32x1xf32> to vector<32x128xf32>
    %25 = arith.addf %22, %24 : vector<32x128xf32>
    %cst_17 = arith.constant 0.000000e+00 : f32
    %26 = vector.broadcast %cst_17 : f32 to vector<32x128xf32>
    %27 = arith.maximumf %25, %26 : vector<32x128xf32>
    %c0_18 = arith.constant 0 : index
    %c0_19 = arith.constant 0 : index
    %28 = vector.load %arg8[%c0_18, %c0_19] : memref<16x32xf32, #tpu.memory_space<vmem>>, vector<16x32xf32>
    %cst_20 = arith.constant dense<0.000000e+00> : vector<16x128xf32>
    %29 = tpu.matmul %28, %27, %cst_20 {dimension_numbers = #tpu.dot_dimension_numbers<[1], [0], [0], [1], [0, 0, 1, 1], [], []>} : vector<16x32xf32>, vector<32x128xf32>, vector<16x128xf32> -> vector<16x128xf32>
    %c0_21 = arith.constant 0 : index
    %c0_22 = arith.constant 0 : index
    %30 = vector.load %arg9[%c0_21, %c0_22] : memref<16x1xf32, #tpu.memory_space<vmem>>, vector<16x1xf32>
    %31 = vector.broadcast %30 : vector<16x1xf32> to vector<16x128xf32>
    %32 = arith.addf %29, %31 : vector<16x128xf32>
    %cst_23 = arith.constant 0.000000e+00 : f32
    %33 = vector.broadcast %cst_23 : f32 to vector<16x128xf32>
    %34 = arith.maximumf %32, %33 : vector<16x128xf32>
    %c0_24 = arith.constant 0 : index
    %c0_25 = arith.constant 0 : index
    %35 = vector.load %arg10[%c0_24, %c0_25] : memref<8x16xf32, #tpu.memory_space<vmem>>, vector<8x16xf32>
    %cst_26 = arith.constant dense<0.000000e+00> : vector<8x128xf32>
    %36 = tpu.matmul %35, %34, %cst_26 {dimension_numbers = #tpu.dot_dimension_numbers<[1], [0], [0], [1], [0, 0, 1, 1], [], []>} : vector<8x16xf32>, vector<16x128xf32>, vector<8x128xf32> -> vector<8x128xf32>
    %c0_27 = arith.constant 0 : index
    %c0_28 = arith.constant 0 : index
    %37 = vector.load %arg11[%c0_27, %c0_28] : memref<8x1xf32, #tpu.memory_space<vmem>>, vector<8x1xf32>
    %38 = vector.broadcast %37 : vector<8x1xf32> to vector<8x128xf32>
    %39 = arith.addf %36, %38 : vector<8x128xf32>
    %cst_29 = arith.constant 0.000000e+00 : f32
    %40 = vector.broadcast %cst_29 : f32 to vector<8x128xf32>
    %41 = arith.maximumf %39, %40 : vector<8x128xf32>
    %c0_30 = arith.constant 0 : index
    %c0_31 = arith.constant 0 : index
    %42 = vector.load %arg12[%c0_30, %c0_31] : memref<8x1xf32, #tpu.memory_space<vmem>>, vector<8x1xf32>
    %43 = vector.broadcast %42 : vector<8x1xf32> to vector<8x128xf32>
    %44 = arith.mulf %41, %43 : vector<8x128xf32>
    %cst_32 = arith.constant dense<0.000000e+00> : vector<128xf32>
    %45 = vector.multi_reduction <add>, %44, %cst_32 [0] : vector<8x128xf32> to vector<128xf32>
    %46 = vector.shape_cast %45 : vector<128xf32> to vector<1x128xf32>
    %c0_33 = arith.constant 0 : index
    %c0_34 = arith.constant 0 : index
    %47 = vector.load %arg13[%c0_33, %c0_34] : memref<1x1xf32, #tpu.memory_space<vmem>>, vector<1x1xf32>
    %48 = vector.broadcast %47 : vector<1x1xf32> to vector<1x128xf32>
    %49 = arith.addf %46, %48 : vector<1x128xf32>
    %50 = vector.shape_cast %49 : vector<1x128xf32> to vector<1x1x128xf32>
    %c0_35 = arith.constant 0 : index
    %c0_36 = arith.constant 0 : index
    %c0_37 = arith.constant 0 : index
    %51 = vector.load %arg14[%c0_35, %c0_36, %c0_37] : memref<1x1x128xf32, #tpu.memory_space<vmem>>, vector<1x1x128xf32>
    tpu.vector_store %arg14[%c0_35, %c0_36, %c0_37], %50 {strides = array<i32>} : memref<1x1x128xf32, #tpu.memory_space<vmem>>, vector<1x1x128xf32>,
    return
  }
  func.func @transform_0(%arg0: i32) -> (i32, i32) {
    %c0_i32 = arith.constant 0 : i32
    %c0_i32_0 = arith.constant 0 : i32
    return %arg0, %c0_i32 : i32, i32
  }
  func.func @transform_1(%arg0: i32) -> (i32, i32) {
    %c0_i32 = arith.constant 0 : i32
    %c0_i32_0 = arith.constant 0 : i32
    %c0_i32_1 = arith.constant 0 : i32
    return %c0_i32, %c0_i32_0 : i32, i32
  }
  func.func @transform_2(%arg0: i32) -> (i32, i32) {
    %c0_i32 = arith.constant 0 : i32
    %c0_i32_0 = arith.constant 0 : i32
    %c0_i32_1 = arith.constant 0 : i32
    return %c0_i32, %c0_i32_0 : i32, i32
  }
  func.func @transform_3(%arg0: i32) -> (i32, i32) {
    %c0_i32 = arith.constant 0 : i32
    %c0_i32_0 = arith.constant 0 : i32
    %c0_i32_1 = arith.constant 0 : i32
    return %c0_i32, %c0_i32_0 : i32, i32
  }
  func.func @transform_4(%arg0: i32) -> (i32, i32) {
    %c0_i32 = arith.constant 0 : i32
    %c0_i32_0 = arith.constant 0 : i32
    %c0_i32_1 = arith.constant 0 : i32
    return %c0_i32, %c0_i32_0 : i32, i32
  }
  func.func @transform_5(%arg0: i32) -> (i32, i32) {
    %c0_i32 = arith.constant 0 : i32
    %c0_i32_0 = arith.constant 0 : i32
    %c0_i32_1 = arith.constant 0 : i32
    return %c0_i32, %c0_i32_0 : i32, i32
  }
  func.func @transform_6(%arg0: i32) -> (i32, i32) {
    %c0_i32 = arith.constant 0 : i32
    %c0_i32_0 = arith.constant 0 : i32
    %c0_i32_1 = arith.constant 0 : i32
    return %c0_i32, %c0_i32_0 : i32, i32
  }
  func.func @transform_7(%arg0: i32) -> (i32, i32) {
    %c0_i32 = arith.constant 0 : i32
    %c0_i32_0 = arith.constant 0 : i32
    %c0_i32_1 = arith.constant 0 : i32
    return %c0_i32, %c0_i32_0 : i32, i32
  }
  func.func @transform_8(%arg0: i32) -> (i32, i32) {
    %c0_i32 = arith.constant 0 : i32
    %c0_i32_0 = arith.constant 0 : i32
    %c0_i32_1 = arith.constant 0 : i32
    return %c0_i32, %c0_i32_0 : i32, i32
  }
  func.func @transform_9(%arg0: i32) -> (i32, i32) {
    %c0_i32 = arith.constant 0 : i32
    %c0_i32_0 = arith.constant 0 : i32
    %c0_i32_1 = arith.constant 0 : i32
    return %c0_i32, %c0_i32_0 : i32, i32
  }
  func.func @transform_10(%arg0: i32) -> (i32, i32) {
    %c0_i32 = arith.constant 0 : i32
    %c0_i32_0 = arith.constant 0 : i32
    %c0_i32_1 = arith.constant 0 : i32
    return %c0_i32, %c0_i32_0 : i32, i32
  }
  func.func @transform_11(%arg0: i32) -> (i32, i32) {
    %c0_i32 = arith.constant 0 : i32
    %c0_i32_0 = arith.constant 0 : i32
    %c0_i32_1 = arith.constant 0 : i32
    return %c0_i32, %c0_i32_0 : i32, i32
  }
  func.func @transform_12(%arg0: i32) -> (i32, i32) {
    %c0_i32 = arith.constant 0 : i32
    %c0_i32_0 = arith.constant 0 : i32
    %c0_i32_1 = arith.constant 0 : i32
    return %c0_i32, %c0_i32_0 : i32, i32
  }
  func.func @transform_13(%arg0: i32) -> (i32, i32, i32) {
    %c0_i32 = arith.constant 0 : i32
    %c0_i32_0 = arith.constant 0 : i32
    %c0_i32_1 = arith.constant 0 : i32
    return %arg0, %c0_i32, %c0_i32_0 : i32, i32, i32
  }
}

</mosaic_0001>

<llo_original>
// kernel: tpu_custom_call.1
$region0: #{tpu_custom_call.1}
  #allocation0 [shape = 'u32[]', space=smem, size = 0x4, offset = 0x4, fixed_abs, tag = 'smem constant byte address 0x4 - core index']
  #allocation1 [shape = 'u32[144,128]{1,0:T(1,128)}', space=vmem, size = 0x12000, scoped, tag = 'internal scratch']
  #allocation2 [shape = 'f32[1,1]{1,0:T(1,128)S(1)}', space=vmem, size = 0x200, scoped, tag = 'scoped memory for tpu_custom_call.1']
  %s0 = inlined_call_operand.vmem [shape: f32[128,92], index: 0, kind: input, shape index: {}]
  %s1 = inlined_call_operand.vmem [shape: f32[92,128], index: 1, kind: input, shape index: {}]
  %s2 = inlined_call_operand.vmem [shape: f32[1,128], index: 2, kind: input, shape index: {}]
  %s3 = inlined_call_operand.vmem [shape: f32[64,128], index: 3, kind: input, shape index: {}]
  %s4 = inlined_call_operand.vmem [shape: f32[64,1], index: 4, kind: input, shape index: {}]
  %s5 = inlined_call_operand.vmem [shape: f32[32,64], index: 5, kind: input, shape index: {}]
  %s6 = inlined_call_operand.vmem [shape: f32[32,1], index: 6, kind: input, shape index: {}]
  %s7 = inlined_call_operand.vmem [shape: f32[16,32], index: 7, kind: input, shape index: {}]
  %s8 = inlined_call_operand.vmem [shape: f32[16,1], index: 8, kind: input, shape index: {}]
  %s9 = inlined_call_operand.vmem [shape: f32[8,16], index: 9, kind: input, shape index: {}]
  %s10 = inlined_call_operand.vmem [shape: f32[8,1], index: 10, kind: input, shape index: {}]
  %s11 = inlined_call_operand.vmem [shape: f32[8,1], index: 11, kind: input, shape index: {}]
  %s12 = inlined_call_operand.<no memory space> [shape: f32[1,1], index: 12, kind: input, shape index: {}]
  %s13 = inlined_call_operand.hbm [shape: f32[1,1,128], index: 13, kind: output, shape index: {}]
  %s14 = sld [smem:[#allocation0]]
  $region62: #{tpu_custom_call.1} parent=0
    _
  %s16 = ssub.s32 1, %s14
  %s17 = scalar_select 0, %s16, %s14
  %v18 = vstv %s12
  %19 = vst [vmem:[#allocation2] sm:$0x1] %v18
  $region1: #{tpu_custom_call.1} parent=0
    #allocation3 [shape = 'u8[512]{0}', space=vmem, size = 0x400, scoped, tag = 'output window, operand 0, single buffered']
    #allocation4 [shape = 's32[1]{0}', space=sflag, size = 0x4, scoped, tag = 'scoped memory for tpu_custom_call.1']
    %20 = vsyncpa [#allocation4], 0
    // Predicated region
    $region2: #{tpu_custom_call.1} parent=1 // pred_check
      _
    $region3: #{tpu_custom_call.1} parent=1 // pred_check_branch
      %22 = sbr.rel (0) target = $region5
    $region4: #{tpu_custom_call.1} parent=1 // pred_region
      _
    $region5: #{tpu_custom_call.1} parent=1 // pred_fallthru
      _
    // Predicated region
    $region6: #{tpu_custom_call.1} parent=1 // pred_check
      _
    $region7: #{tpu_custom_call.1} parent=1 // pred_check_branch
      %24 = sbr.rel (0) target = $region9
    $region8: #{tpu_custom_call.1} parent=1 // pred_region
      _
    $region9: #{tpu_custom_call.1} parent=1 // pred_fallthru
      _
    // Predicated region
    $region10: #{tpu_custom_call.1} parent=1 // pred_check
      _
    $region11: #{tpu_custom_call.1} parent=1 // pred_check_branch
      %26 = sbr.rel (0) target = $region13
    $region12: #{tpu_custom_call.1} parent=1 // pred_region
      _
    $region13: #{tpu_custom_call.1} parent=1 // pred_fallthru
      _
    // Predicated region
    $region14: #{tpu_custom_call.1} parent=1 // pred_check
      _
    $region15: #{tpu_custom_call.1} parent=1 // pred_check_branch
      %28 = sbr.rel (0) target = $region17
    $region16: #{tpu_custom_call.1} parent=1 // pred_region
      _
    $region17: #{tpu_custom_call.1} parent=1 // pred_fallthru
      _
    // Predicated region
    $region18: #{tpu_custom_call.1} parent=1 // pred_check
      _
    $region19: #{tpu_custom_call.1} parent=1 // pred_check_branch
      %30 = sbr.rel (0) target = $region21
    $region20: #{tpu_custom_call.1} parent=1 // pred_region
      _
    $region21: #{tpu_custom_call.1} parent=1 // pred_fallthru
      _
    // Predicated region
    $region22: #{tpu_custom_call.1} parent=1 // pred_check
      _
    $region23: #{tpu_custom_call.1} parent=1 // pred_check_branch
      %32 = sbr.rel (0) target = $region25
    $region24: #{tpu_custom_call.1} parent=1 // pred_region
      _
    $region25: #{tpu_custom_call.1} parent=1 // pred_fallthru
      _
    // Predicated region
    $region26: #{tpu_custom_call.1} parent=1 // pred_check
      _
    $region27: #{tpu_custom_call.1} parent=1 // pred_check_branch
      %34 = sbr.rel (0) target = $region29
    $region28: #{tpu_custom_call.1} parent=1 // pred_region
      _
    $region29: #{tpu_custom_call.1} parent=1 // pred_fallthru
      _
    // Predicated region
    $region30: #{tpu_custom_call.1} parent=1 // pred_check
      _
    $region31: #{tpu_custom_call.1} parent=1 // pred_check_branch
      %36 = sbr.rel (0) target = $region33
    $region32: #{tpu_custom_call.1} parent=1 // pred_region
      _
    $region33: #{tpu_custom_call.1} parent=1 // pred_fallthru
      _
    // Predicated region
    $region34: #{tpu_custom_call.1} parent=1 // pred_check
      _
    $region35: #{tpu_custom_call.1} parent=1 // pred_check_branch
      %38 = sbr.rel (0) target = $region37
    $region36: #{tpu_custom_call.1} parent=1 // pred_region
      _
    $region37: #{tpu_custom_call.1} parent=1 // pred_fallthru
      _
    // Predicated region
    $region38: #{tpu_custom_call.1} parent=1 // pred_check
      _
    $region39: #{tpu_custom_call.1} parent=1 // pred_check_branch
      %40 = sbr.rel (0) target = $region41
    $region40: #{tpu_custom_call.1} parent=1 // pred_region
      _
    $region41: #{tpu_custom_call.1} parent=1 // pred_fallthru
      _
    // Predicated region
    $region42: #{tpu_custom_call.1} parent=1 // pred_check
      _
    $region43: #{tpu_custom_call.1} parent=1 // pred_check_branch
      %42 = sbr.rel (0) target = $region45
    $region44: #{tpu_custom_call.1} parent=1 // pred_region
      _
    $region45: #{tpu_custom_call.1} parent=1 // pred_fallthru
      _
    // Predicated region
    $region46: #{tpu_custom_call.1} parent=1 // pred_check
      _
    $region47: #{tpu_custom_call.1} parent=1 // pred_check_branch
      %44 = sbr.rel (0) target = $region49
    $region48: #{tpu_custom_call.1} parent=1 // pred_region
      _
    $region49: #{tpu_custom_call.1} parent=1 // pred_fallthru
      _
    // Predicated region
    $region50: #{tpu_custom_call.1} parent=1 // pred_check
      _
    $region51: #{tpu_custom_call.1} parent=1 // pred_check_branch
      %46 = sbr.rel (0) target = $region53
    $region52: #{tpu_custom_call.1} parent=1 // pred_region
      _
    $region53: #{tpu_custom_call.1} parent=1 // pred_fallthru
      _
    %v47 = vld [vmem:[%s0] sm:$0xff]
    %v48 = vld [vmem:[%s0 + $0x8] sm:$0xff]
    %v49 = vld [vmem:[%s0 + $0x10] sm:$0xff]
    %v50 = vld [vmem:[%s0 + $0x18] sm:$0xff]
    %v51 = vld [vmem:[%s0 + $0x20] sm:$0xff]
    %v52 = vld [vmem:[%s0 + $0x28] sm:$0xff]
    %v53 = vld [vmem:[%s0 + $0x30] sm:$0xff]
    %v54 = vld [vmem:[%s0 + $0x38] sm:$0xff]
    %v55 = vld [vmem:[%s0 + $0x40] sm:$0xff]
    %v56 = vld [vmem:[%s0 + $0x48] sm:$0xff]
    %v57 = vld [vmem:[%s0 + $0x50] sm:$0xff]
    %v58 = vld [vmem:[%s0 + $0x58] sm:$0xff]
    %v59 = vld [vmem:[%s0 + $0x60] sm:$0xff]
    %v60 = vld [vmem:[%s0 + $0x68] sm:$0xff]
    %v61 = vld [vmem:[%s0 + $0x70] sm:$0xff]
    %v62 = vld [vmem:[%s0 + $0x78] sm:$0xff]
    %v63 = vld [vmem:[%s1] sm:$0xff]
    %v64 = vld [vmem:[%s1 + $0x8] sm:$0xff]
    %v65 = vld [vmem:[%s1 + $0x10] sm:$0xff]
    %v66 = vld [vmem:[%s1 + $0x18] sm:$0xff]
    %v67 = vld [vmem:[%s1 + $0x20] sm:$0xff]
    %v68 = vld [vmem:[%s1 + $0x28] sm:$0xff]
    %v69 = vld [vmem:[%s1 + $0x30] sm:$0xff]
    %v70 = vld [vmem:[%s1 + $0x38] sm:$0xff]
    %v71 = vld [vmem:[%s1 + $0x40] sm:$0xff]
    %v72 = vld [vmem:[%s1 + $0x48] sm:$0xff]
    %v73 = vld [vmem:[%s1 + $0x50] sm:$0xff]
    %v74 = vld [vmem:[%s1 + $0x58] sm:$0xf]
    %v75 = vld [vmem:[%s2] sm:$0x1]
    %v77 = vlaneseq
    %v78 = vshrl.u32 %v77, 7
    %v79 = vsub.s32 0, %v78
    %v80 = vrot.slane %v75, %v79
    %vm82 = vcmask 752640
    %v84 = vsel %vm82, %v47, 0
    %v87 = vsel %vm82, %v48, 0
    %v90 = vsel %vm82, %v49, 0
    %v93 = vsel %vm82, %v50, 0
    %v96 = vsel %vm82, %v51, 0
    %v99 = vsel %vm82, %v52, 0
    %v102 = vsel %vm82, %v53, 0
    %v105 = vsel %vm82, %v54, 0
    %v108 = vsel %vm82, %v55, 0
    %v111 = vsel %vm82, %v56, 0
    %v114 = vsel %vm82, %v57, 0
    %v117 = vsel %vm82, %v58, 0
    %v120 = vsel %vm82, %v59, 0
    %v123 = vsel %vm82, %v60, 0
    %v126 = vsel %vm82, %v61, 0
    %v129 = vsel %vm82, %v62, 0
    %vm131 = vcmask 1043456
    %v133 = vsel %vm131, %v74, 0
    %135 = vmatprep.subr.mxu0 0.0
    %136 = vmatpush1.msra.mxu0 0.0
    %137 = vmatprep.subr.mxu0 0.0
    %138 = vmatpush1.msra.mxu0 0.0
    %139 = vmatprep.subr.mxu0 0.0
    %140 = vmatpush1.msra.mxu0 0.0
    %141 = vmatprep.subr.mxu0 0.0
    %142 = vmatpush1.msra.mxu0 0.0
    %143 = vmatprep.subr.mxu0 0.0
    %144 = vmatpush1.msra.mxu0 %v133
    %145 = vmatprep.subr.mxu0 0.0
    %146 = vmatpush1.msra.mxu0 %v73
    %147 = vmatprep.subr.mxu0 0.0
    %148 = vmatpush1.msra.mxu0 %v72
    %149 = vmatprep.subr.mxu0 0.0
    %150 = vmatpush1.msra.mxu0 %v71
    %151 = vmatprep.subr.mxu0 0.0
    %152 = vmatpush1.msra.mxu0 %v70
    %153 = vmatprep.subr.mxu0 0.0
    %154 = vmatpush1.msra.mxu0 %v69
    %155 = vmatprep.subr.mxu0 0.0
    %156 = vmatpush1.msra.mxu0 %v68
    %157 = vmatprep.subr.mxu0 0.0
    %158 = vmatpush1.msra.mxu0 %v67
    %159 = vmatprep.subr.mxu0 0.0
    %160 = vmatpush1.msra.mxu0 %v66
    %161 = vmatprep.subr.mxu0 0.0
    %162 = vmatpush1.msra.mxu0 %v65
    %163 = vmatprep.subr.mxu0 0.0
    %164 = vmatpush1.msra.mxu0 %v64
    %165 = vmatprep.subr.mxu0 0.0
    %166 = vmatpush1.msra.mxu0 %v63
    %167 = vmatprep.subr.mxu0 0.0
    %168 = vmatpush2.msra.mxu0 0.0
    %169 = vmatprep.subr.mxu0 0.0
    %170 = vmatpush2.msra.mxu0 0.0
    %171 = vmatprep.subr.mxu0 0.0
    %172 = vmatpush2.msra.mxu0 0.0
    %173 = vmatprep.subr.mxu0 0.0
    %174 = vmatpush2.msra.mxu0 0.0
    %175 = vmatprep.subr.mxu0 0.0
    %176 = vmatpush2.msra.mxu0 0.0
    %177 = vmatprep.subr.mxu0 0.0
    %178 = vmatpush2.msra.mxu0 0.0
    %179 = vmatprep.subr.mxu0 0.0
    %180 = vmatpush2.msra.mxu0 0.0
    %181 = vmatprep.subr.mxu0 0.0
    %182 = vmatpush2.msra.mxu0 0.0
    %183 = vmatprep.subr.mxu0 0.0
    %184 = vmatpush2.msra.mxu0 0.0
    %185 = vmatprep.subr.mxu0 0.0
    %186 = vmatpush2.msra.mxu0 0.0
    %187 = vmatprep.subr.mxu0 0.0
    %188 = vmatpush2.msra.mxu0 0.0
    %189 = vmatprep.subr.mxu0 0.0
    %190 = vmatpush2.msra.mxu0 0.0
    %191 = vmatprep.subr.mxu0 0.0
    %192 = vmatpush2.msra.mxu0 0.0
    %193 = vmatprep.subr.mxu0 0.0
    %194 = vmatpush2.msra.mxu0 0.0
    %195 = vmatprep.subr.mxu0 0.0
    %196 = vmatpush2.msra.mxu0 0.0
    %197 = vmatprep.subr.mxu0 0.0
    %198 = vmatpush2.msra.mxu0 0.0
    %199 = vmatprep.mubr.f32.mxu0 0.0
    %200 = vmatmul.mubr.f32.gmra.mxu0 %v84
    %v201 = vpop.f32.mrf.mxu0
    %v202 = vadd.f32 %v80, %v201
    %v203 = vpop.f32.mrf.mxu0
    %204 = vmatprep.mubr.f32.mxu0 0.0
    %205 = vmatmul.mubr.f32.gmra.mxu0 %v87
    %v206 = vpop.f32.mrf.mxu0
    %v207 = vadd.f32 %v80, %v206
    %v208 = vpop.f32.mrf.mxu0
    %209 = vmatprep.mubr.f32.mxu0 0.0
    %210 = vmatmul.mubr.f32.gmra.mxu0 %v90
    %v211 = vpop.f32.mrf.mxu0
    %v212 = vadd.f32 %v80, %v211
    %v213 = vpop.f32.mrf.mxu0
    %214 = vmatprep.mubr.f32.mxu0 0.0
    %215 = vmatmul.mubr.f32.gmra.mxu0 %v93
    %v216 = vpop.f32.mrf.mxu0
    %v217 = vadd.f32 %v80, %v216
    %v218 = vpop.f32.mrf.mxu0
    %219 = vmatprep.mubr.f32.mxu0 0.0
    %220 = vmatmul.mubr.f32.gmra.mxu0 %v96
    %v221 = vpop.f32.mrf.mxu0
    %v222 = vadd.f32 %v80, %v221
    %v223 = vpop.f32.mrf.mxu0
    %224 = vmatprep.mubr.f32.mxu0 0.0
    %225 = vmatmul.mubr.f32.gmra.mxu0 %v99
    %v226 = vpop.f32.mrf.mxu0
    %v227 = vadd.f32 %v80, %v226
    %v228 = vpop.f32.mrf.mxu0
    %229 = vmatprep.mubr.f32.mxu0 0.0
    %230 = vmatmul.mubr.f32.gmra.mxu0 %v102
    %v231 = vpop.f32.mrf.mxu0
    %v232 = vadd.f32 %v80, %v231
    %v233 = vpop.f32.mrf.mxu0
    %234 = vmatprep.mubr.f32.mxu0 0.0
    %235 = vmatmul.mubr.f32.gmra.mxu0 %v105
    %v236 = vpop.f32.mrf.mxu0
    %v237 = vadd.f32 %v80, %v236
    %v238 = vpop.f32.mrf.mxu0
    %239 = vmatprep.mubr.f32.mxu0 0.0
    %240 = vmatmul.mubr.f32.gmra.mxu0 %v108
    %v241 = vpop.f32.mrf.mxu0
    %v242 = vadd.f32 %v80, %v241
    %v243 = vpop.f32.mrf.mxu0
    %244 = vmatprep.mubr.f32.mxu0 0.0
    %245 = vmatmul.mubr.f32.gmra.mxu0 %v111
    %v246 = vpop.f32.mrf.mxu0
    %v247 = vadd.f32 %v80, %v246
    %v248 = vpop.f32.mrf.mxu0
    %249 = vmatprep.mubr.f32.mxu0 0.0
    %250 = vmatmul.mubr.f32.gmra.mxu0 %v114
    %v251 = vpop.f32.mrf.mxu0
    %v252 = vadd.f32 %v80, %v251
    %v253 = vpop.f32.mrf.mxu0
    %254 = vmatprep.mubr.f32.mxu0 0.0
    %255 = vmatmul.mubr.f32.gmra.mxu0 %v117
    %v256 = vpop.f32.mrf.mxu0
    %v257 = vadd.f32 %v80, %v256
    %v258 = vpop.f32.mrf.mxu0
    %259 = vmatprep.mubr.f32.mxu0 0.0
    %260 = vmatmul.mubr.f32.gmra.mxu0 %v120
    %v261 = vpop.f32.mrf.mxu0
    %v262 = vadd.f32 %v80, %v261
    %v263 = vpop.f32.mrf.mxu0
    %264 = vmatprep.mubr.f32.mxu0 0.0
    %265 = vmatmul.mubr.f32.gmra.mxu0 %v123
    %v266 = vpop.f32.mrf.mxu0
    %v267 = vadd.f32 %v80, %v266
    %v268 = vpop.f32.mrf.mxu0
    %269 = vmatprep.mubr.f32.mxu0 0.0
    %270 = vmatmul.mubr.f32.gmra.mxu0 %v126
    %v271 = vpop.f32.mrf.mxu0
    %v272 = vadd.f32 %v80, %v271
    %v273 = vpop.f32.mrf.mxu0
    %274 = vmatprep.mubr.f32.mxu0 0.0
    %275 = vmatmul.mubr.f32.gmra.mxu0 %v129
    %v276 = vpop.f32.mrf.mxu0
    %v277 = vadd.f32 %v80, %v276
    %v278 = vpop.f32.mrf.mxu0
    %279 = vdwg.mxu0
    %v280 = vxor.u32 %v202, 2147483648
    %v281 = vxor.u32 %v207, 2147483648
    %v282 = vxor.u32 %v212, 2147483648
    %v283 = vxor.u32 %v217, 2147483648
    %v284 = vxor.u32 %v222, 2147483648
    %v285 = vxor.u32 %v227, 2147483648
    %v286 = vxor.u32 %v232, 2147483648
    %v287 = vxor.u32 %v237, 2147483648
    %v288 = vxor.u32 %v242, 2147483648
    %v289 = vxor.u32 %v247, 2147483648
    %v290 = vxor.u32 %v252, 2147483648
    %v291 = vxor.u32 %v257, 2147483648
    %v292 = vxor.u32 %v262, 2147483648
    %v293 = vxor.u32 %v267, 2147483648
    %v294 = vxor.u32 %v272, 2147483648
    %v295 = vxor.u32 %v277, 2147483648
    %v296 = vmul.f32 %v280, 1.442695
    %v297 = vpow.pop %v296
    %v298 = vmul.f32 %v281, 1.442695
    %v299 = vpow.pop %v298
    %v300 = vmul.f32 %v282, 1.442695
    %v301 = vpow.pop %v300
    %v302 = vmul.f32 %v283, 1.442695
    %v303 = vpow.pop %v302
    %v304 = vmul.f32 %v284, 1.442695
    %v305 = vpow.pop %v304
    %v306 = vmul.f32 %v285, 1.442695
    %v307 = vpow.pop %v306
    %v308 = vmul.f32 %v286, 1.442695
    %v309 = vpow.pop %v308
    %v310 = vmul.f32 %v287, 1.442695
    %v311 = vpow.pop %v310
    %v312 = vmul.f32 %v288, 1.442695
    %v313 = vpow.pop %v312
    %v314 = vmul.f32 %v289, 1.442695
    %v315 = vpow.pop %v314
    %v316 = vmul.f32 %v290, 1.442695
    %v317 = vpow.pop %v316
    %v318 = vmul.f32 %v291, 1.442695
    %v319 = vpow.pop %v318
    %v320 = vmul.f32 %v292, 1.442695
    %v321 = vpow.pop %v320
    %v322 = vmul.f32 %v293, 1.442695
    %v323 = vpow.pop %v322
    %v324 = vmul.f32 %v294, 1.442695
    %v325 = vpow.pop %v324
    %v326 = vmul.f32 %v295, 1.442695
    %v327 = vpow.pop %v326
    %v328 = vadd.f32 %v297, 1.0
    %v329 = vadd.f32 %v299, 1.0
    %v330 = vadd.f32 %v301, 1.0
    %v331 = vadd.f32 %v303, 1.0
    %v332 = vadd.f32 %v305, 1.0
    %v333 = vadd.f32 %v307, 1.0
    %v334 = vadd.f32 %v309, 1.0
    %v335 = vadd.f32 %v311, 1.0
    %v336 = vadd.f32 %v313, 1.0
    %v337 = vadd.f32 %v315, 1.0
    %v338 = vadd.f32 %v317, 1.0
    %v339 = vadd.f32 %v319, 1.0
    %v340 = vadd.f32 %v321, 1.0
    %v341 = vadd.f32 %v323, 1.0
    %v342 = vadd.f32 %v325, 1.0
    %v343 = vadd.f32 %v327, 1.0
    %v344 = vrcp.pop %v328
    %v345 = vmul.f32 1.0, %v344
    %v346 = vrcp.pop %v329
    %v347 = vmul.f32 1.0, %v346
    %v348 = vrcp.pop %v330
    %v349 = vmul.f32 1.0, %v348
    %v350 = vrcp.pop %v331
    %v351 = vmul.f32 1.0, %v350
    %v352 = vrcp.pop %v332
    %v353 = vmul.f32 1.0, %v352
    %v354 = vrcp.pop %v333
    %v355 = vmul.f32 1.0, %v354
    %v356 = vrcp.pop %v334
    %v357 = vmul.f32 1.0, %v356
    %v358 = vrcp.pop %v335
    %v359 = vmul.f32 1.0, %v358
    %v360 = vrcp.pop %v336
    %v361 = vmul.f32 1.0, %v360
    %v362 = vrcp.pop %v337
    %v363 = vmul.f32 1.0, %v362
    %v364 = vrcp.pop %v338
    %v365 = vmul.f32 1.0, %v364
    %v366 = vrcp.pop %v339
    %v367 = vmul.f32 1.0, %v366
    %v368 = vrcp.pop %v340
    %v369 = vmul.f32 1.0, %v368
    %v370 = vrcp.pop %v341
    %v371 = vmul.f32 1.0, %v370
    %v372 = vrcp.pop %v342
    %v373 = vmul.f32 1.0, %v372
    %v374 = vrcp.pop %v343
    %v375 = vmul.f32 1.0, %v374
    %v376 = vld [vmem:[%s3] sm:$0xff]
    %v377 = vld [vmem:[%s3 + $0x8] sm:$0xff]
    %v378 = vld [vmem:[%s3 + $0x10] sm:$0xff]
    %v379 = vld [vmem:[%s3 + $0x18] sm:$0xff]
    %v380 = vld [vmem:[%s3 + $0x20] sm:$0xff]
    %v381 = vld [vmem:[%s3 + $0x28] sm:$0xff]
    %v382 = vld [vmem:[%s3 + $0x30] sm:$0xff]
    %v383 = vld [vmem:[%s3 + $0x38] sm:$0xff]
    %v384 = vld [vmem:[%s4] sm:$0xff]
    %v385 = vld [vmem:[%s4 + $0x8] sm:$0xff]
    %v386 = vld [vmem:[%s4 + $0x10] sm:$0xff]
    %v387 = vld [vmem:[%s4 + $0x18] sm:$0xff]
    %v388 = vld [vmem:[%s4 + $0x20] sm:$0xff]
    %v389 = vld [vmem:[%s4 + $0x28] sm:$0xff]
    %v390 = vld [vmem:[%s4 + $0x30] sm:$0xff]
    %v391 = vld [vmem:[%s4 + $0x38] sm:$0xff]
    %393 = vset.pattern.permute.xlu0 0
    %394 = vperm.xlu0 %393, %v384
    %v395 = vpop.permute.xlu0 %394
    %398 = vset.pattern.permute.xlu0 0
    %399 = vperm.xlu0 %398, %v385
    %v400 = vpop.permute.xlu0 %399
    %403 = vset.pattern.permute.xlu0 0
    %404 = vperm.xlu0 %403, %v386
    %v405 = vpop.permute.xlu0 %404
    %408 = vset.pattern.permute.xlu0 0
    %409 = vperm.xlu0 %408, %v387
    %v410 = vpop.permute.xlu0 %409
    %413 = vset.pattern.permute.xlu0 0
    %414 = vperm.xlu0 %413, %v388
    %v415 = vpop.permute.xlu0 %414
    %418 = vset.pattern.permute.xlu0 0
    %419 = vperm.xlu0 %418, %v389
    %v420 = vpop.permute.xlu0 %419
    %423 = vset.pattern.permute.xlu0 0
    %424 = vperm.xlu0 %423, %v390
    %v425 = vpop.permute.xlu0 %424
    %428 = vset.pattern.permute.xlu0 0
    %429 = vperm.xlu0 %428, %v391
    %v430 = vpop.permute.xlu0 %429
    %432 = vmatprep.subr.mxu0 0.0
    %433 = vmatpush1.xpose.msra.mxu0 %v375
    %434 = vmatprep.subr.mxu0 0.0
    %435 = vmatpush1.xpose.msra.mxu0 %v373
    %436 = vmatprep.subr.mxu0 0.0
    %437 = vmatpush1.xpose.msra.mxu0 %v371
    %438 = vmatprep.subr.mxu0 0.0
    %439 = vmatpush1.xpose.msra.mxu0 %v369
    %440 = vmatprep.subr.mxu0 0.0
    %441 = vmatpush1.xpose.msra.mxu0 %v367
    %442 = vmatprep.subr.mxu0 0.0
    %443 = vmatpush1.xpose.msra.mxu0 %v365
    %444 = vmatprep.subr.mxu0 0.0
    %445 = vmatpush1.xpose.msra.mxu0 %v363
    %446 = vmatprep.subr.mxu0 0.0
    %447 = vmatpush1.xpose.msra.mxu0 %v361
    %448 = vmatprep.subr.mxu0 0.0
    %449 = vmatpush1.xpose.msra.mxu0 %v359
    %450 = vmatprep.subr.mxu0 0.0
    %451 = vmatpush1.xpose.msra.mxu0 %v357
    %452 = vmatprep.subr.mxu0 0.0
    %453 = vmatpush1.xpose.msra.mxu0 %v355
    %454 = vmatprep.subr.mxu0 0.0
    %455 = vmatpush1.xpose.msra.mxu0 %v353
    %456 = vmatprep.subr.mxu0 0.0
    %457 = vmatpush1.xpose.msra.mxu0 %v351
    %458 = vmatprep.subr.mxu0 0.0
    %459 = vmatpush1.xpose.msra.mxu0 %v349
    %460 = vmatprep.subr.mxu0 0.0
    %461 = vmatpush1.xpose.msra.mxu0 %v347
    %462 = vmatprep.subr.mxu0 0.0
    %463 = vmatpush1.xpose.msra.mxu0 %v345
    %464 = vmatprep.subr.mxu0 0.0
    %465 = vmatpush2.xpose.msra.mxu0 0.0
    %466 = vmatprep.subr.mxu0 0.0
    %467 = vmatpush2.xpose.msra.mxu0 0.0
    %468 = vmatprep.subr.mxu0 0.0
    %469 = vmatpush2.xpose.msra.mxu0 0.0
    %470 = vmatprep.subr.mxu0 0.0
    %471 = vmatpush2.xpose.msra.mxu0 0.0
    %472 = vmatprep.subr.mxu0 0.0
    %473 = vmatpush2.xpose.msra.mxu0 0.0
    %474 = vmatprep.subr.mxu0 0.0
    %475 = vmatpush2.xpose.msra.mxu0 0.0
    %476 = vmatprep.subr.mxu0 0.0
    %477 = vmatpush2.xpose.msra.mxu0 0.0
    %478 = vmatprep.subr.mxu0 0.0
    %479 = vmatpush2.xpose.msra.mxu0 0.0
    %480 = vmatprep.subr.mxu0 0.0
    %481 = vmatpush2.xpose.msra.mxu0 0.0
    %482 = vmatprep.subr.mxu0 0.0
    %483 = vmatpush2.xpose.msra.mxu0 0.0
    %484 = vmatprep.subr.mxu0 0.0
    %485 = vmatpush2.xpose.msra.mxu0 0.0
    %486 = vmatprep.subr.mxu0 0.0
    %487 = vmatpush2.xpose.msra.mxu0 0.0
    %488 = vmatprep.subr.mxu0 0.0
    %489 = vmatpush2.xpose.msra.mxu0 0.0
    %490 = vmatprep.subr.mxu0 0.0
    %491 = vmatpush2.xpose.msra.mxu0 0.0
    %492 = vmatprep.subr.mxu0 0.0
    %493 = vmatpush2.xpose.msra.mxu0 0.0
    %494 = vmatprep.subr.mxu0 0.0
    %495 = vmatpush2.xpose.msra.mxu0 0.0
    %496 = vmatprep.mubr.f32.mxu0 0.0
    %497 = vmatmul.mubr.f32.gmra.mxu0 %v376
    %v498 = vpop.f32.mrf.mxu0
    %v499 = vadd.f32 %v395, %v498
    %v500 = vpop.f32.mrf.mxu0
    %501 = vmatprep.mubr.f32.mxu0 0.0
    %502 = vmatmul.mubr.f32.gmra.mxu0 %v377
    %v503 = vpop.f32.mrf.mxu0
    %v504 = vadd.f32 %v400, %v503
    %v505 = vpop.f32.mrf.mxu0
    %506 = vmatprep.mubr.f32.mxu0 0.0
    %507 = vmatmul.mubr.f32.gmra.mxu0 %v378
    %v508 = vpop.f32.mrf.mxu0
    %v509 = vadd.f32 %v405, %v508
    %v510 = vpop.f32.mrf.mxu0
    %511 = vmatprep.mubr.f32.mxu0 0.0
    %512 = vmatmul.mubr.f32.gmra.mxu0 %v379
    %v513 = vpop.f32.mrf.mxu0
    %v514 = vadd.f32 %v410, %v513
    %v515 = vpop.f32.mrf.mxu0
    %516 = vmatprep.mubr.f32.mxu0 0.0
    %517 = vmatmul.mubr.f32.gmra.mxu0 %v380
    %v518 = vpop.f32.mrf.mxu0
    %v519 = vadd.f32 %v415, %v518
    %v520 = vpop.f32.mrf.mxu0
    %521 = vmatprep.mubr.f32.mxu0 0.0
    %522 = vmatmul.mubr.f32.gmra.mxu0 %v381
    %v523 = vpop.f32.mrf.mxu0
    %v524 = vadd.f32 %v420, %v523
    %v525 = vpop.f32.mrf.mxu0
    %526 = vmatprep.mubr.f32.mxu0 0.0
    %527 = vmatmul.mubr.f32.gmra.mxu0 %v382
    %v528 = vpop.f32.mrf.mxu0
    %v529 = vadd.f32 %v425, %v528
    %v530 = vpop.f32.mrf.mxu0
    %531 = vmatprep.mubr.f32.mxu0 0.0
    %532 = vmatmul.mubr.f32.gmra.mxu0 %v383
    %v533 = vpop.f32.mrf.mxu0
    %v534 = vadd.f32 %v430, %v533
    %v535 = vpop.f32.mrf.mxu0
    %536 = vdwg.mxu0
    %v537 = vxor.u32 %v499, 2147483648
    %v538 = vxor.u32 %v504, 2147483648
    %v539 = vxor.u32 %v509, 2147483648
    %v540 = vxor.u32 %v514, 2147483648
    %v541 = vxor.u32 %v519, 2147483648
    %v542 = vxor.u32 %v524, 2147483648
    %v543 = vxor.u32 %v529, 2147483648
    %v544 = vxor.u32 %v534, 2147483648
    %v545 = vmul.f32 %v537, 1.442695
    %v546 = vpow.pop %v545
    %v547 = vmul.f32 %v538, 1.442695
    %v548 = vpow.pop %v547
    %v549 = vmul.f32 %v539, 1.442695
    %v550 = vpow.pop %v549
    %v551 = vmul.f32 %v540, 1.442695
    %v552 = vpow.pop %v551
    %v553 = vmul.f32 %v541, 1.442695
    %v554 = vpow.pop %v553
    %v555 = vmul.f32 %v542, 1.442695
    %v556 = vpow.pop %v555
    %v557 = vmul.f32 %v543, 1.442695
    %v558 = vpow.pop %v557
    %v559 = vmul.f32 %v544, 1.442695
    %v560 = vpow.pop %v559
    %v561 = vadd.f32 %v546, 1.0
    %v562 = vadd.f32 %v548, 1.0
    %v563 = vadd.f32 %v550, 1.0
    %v564 = vadd.f32 %v552, 1.0
    %v565 = vadd.f32 %v554, 1.0
    %v566 = vadd.f32 %v556, 1.0
    %v567 = vadd.f32 %v558, 1.0
    %v568 = vadd.f32 %v560, 1.0
    %v569 = vrcp.pop %v561
    %v570 = vmul.f32 1.0, %v569
    %v571 = vrcp.pop %v562
    %v572 = vmul.f32 1.0, %v571
    %v573 = vrcp.pop %v563
    %v574 = vmul.f32 1.0, %v573
    %v575 = vrcp.pop %v564
    %v576 = vmul.f32 1.0, %v575
    %v577 = vrcp.pop %v565
    %v578 = vmul.f32 1.0, %v577
    %v579 = vrcp.pop %v566
    %v580 = vmul.f32 1.0, %v579
    %v581 = vrcp.pop %v567
    %v582 = vmul.f32 1.0, %v581
    %v583 = vrcp.pop %v568
    %v584 = vmul.f32 1.0, %v583
    %v585 = vld [vmem:[%s5] sm:$0xff]
    %v586 = vld [vmem:[%s5 + $0x8] sm:$0xff]
    %v587 = vld [vmem:[%s5 + $0x10] sm:$0xff]
    %v588 = vld [vmem:[%s5 + $0x18] sm:$0xff]
    %v589 = vld [vmem:[%s6] sm:$0xff]
    %v590 = vld [vmem:[%s6 + $0x8] sm:$0xff]
    %v591 = vld [vmem:[%s6 + $0x10] sm:$0xff]
    %v592 = vld [vmem:[%s6 + $0x18] sm:$0xff]
    %594 = vset.pattern.permute.xlu0 0
    %595 = vperm.xlu0 %594, %v589
    %v596 = vpop.permute.xlu0 %595
    %599 = vset.pattern.permute.xlu0 0
    %600 = vperm.xlu0 %599, %v590
    %v601 = vpop.permute.xlu0 %600
    %604 = vset.pattern.permute.xlu0 0
    %605 = vperm.xlu0 %604, %v591
    %v606 = vpop.permute.xlu0 %605
    %609 = vset.pattern.permute.xlu0 0
    %610 = vperm.xlu0 %609, %v592
    %v611 = vpop.permute.xlu0 %610
    %vm613 = vcmask 523264
    %v615 = vsel %vm613, %v585, 0
    %v618 = vsel %vm613, %v586, 0
    %v621 = vsel %vm613, %v587, 0
    %v624 = vsel %vm613, %v588, 0
    %626 = vmatprep.subr.mxu0 0.0
    %627 = vmatpush1.msra.mxu0 0.0
    %628 = vmatprep.subr.mxu0 0.0
    %629 = vmatpush1.msra.mxu0 0.0
    %630 = vmatprep.subr.mxu0 0.0
    %631 = vmatpush1.msra.mxu0 0.0
    %632 = vmatprep.subr.mxu0 0.0
    %633 = vmatpush1.msra.mxu0 0.0
    %634 = vmatprep.subr.mxu0 0.0
    %635 = vmatpush1.msra.mxu0 0.0
    %636 = vmatprep.subr.mxu0 0.0
    %637 = vmatpush1.msra.mxu0 0.0
    %638 = vmatprep.subr.mxu0 0.0
    %639 = vmatpush1.msra.mxu0 0.0
    %640 = vmatprep.subr.mxu0 0.0
    %641 = vmatpush1.msra.mxu0 0.0
    %642 = vmatprep.subr.mxu0 0.0
    %643 = vmatpush1.msra.mxu0 %v584
    %644 = vmatprep.subr.mxu0 0.0
    %645 = vmatpush1.msra.mxu0 %v582
    %646 = vmatprep.subr.mxu0 0.0
    %647 = vmatpush1.msra.mxu0 %v580
    %648 = vmatprep.subr.mxu0 0.0
    %649 = vmatpush1.msra.mxu0 %v578
    %650 = vmatprep.subr.mxu0 0.0
    %651 = vmatpush1.msra.mxu0 %v576
    %652 = vmatprep.subr.mxu0 0.0
    %653 = vmatpush1.msra.mxu0 %v574
    %654 = vmatprep.subr.mxu0 0.0
    %655 = vmatpush1.msra.mxu0 %v572
    %656 = vmatprep.subr.mxu0 0.0
    %657 = vmatpush1.msra.mxu0 %v570
    %658 = vmatprep.subr.mxu0 0.0
    %659 = vmatpush2.msra.mxu0 0.0
    %660 = vmatprep.subr.mxu0 0.0
    %661 = vmatpush2.msra.mxu0 0.0
    %662 = vmatprep.subr.mxu0 0.0
    %663 = vmatpush2.msra.mxu0 0.0
    %664 = vmatprep.subr.mxu0 0.0
    %665 = vmatpush2.msra.mxu0 0.0
    %666 = vmatprep.subr.mxu0 0.0
    %667 = vmatpush2.msra.mxu0 0.0
    %668 = vmatprep.subr.mxu0 0.0
    %669 = vmatpush2.msra.mxu0 0.0
    %670 = vmatprep.subr.mxu0 0.0
    %671 = vmatpush2.msra.mxu0 0.0
    %672 = vmatprep.subr.mxu0 0.0
    %673 = vmatpush2.msra.mxu0 0.0
    %674 = vmatprep.subr.mxu0 0.0
    %675 = vmatpush2.msra.mxu0 0.0
    %676 = vmatprep.subr.mxu0 0.0
    %677 = vmatpush2.msra.mxu0 0.0
    %678 = vmatprep.subr.mxu0 0.0
    %679 = vmatpush2.msra.mxu0 0.0
    %680 = vmatprep.subr.mxu0 0.0
    %681 = vmatpush2.msra.mxu0 0.0
    %682 = vmatprep.subr.mxu0 0.0
    %683 = vmatpush2.msra.mxu0 0.0
    %684 = vmatprep.subr.mxu0 0.0
    %685 = vmatpush2.msra.mxu0 0.0
    %686 = vmatprep.subr.mxu0 0.0
    %687 = vmatpush2.msra.mxu0 0.0
    %688 = vmatprep.subr.mxu0 0.0
    %689 = vmatpush2.msra.mxu0 0.0
    %690 = vmatprep.mubr.f32.mxu0 0.0
    %691 = vmatmul.mubr.f32.gmra.mxu0 %v615
    %v692 = vpop.f32.mrf.mxu0
    %v693 = vadd.f32 %v596, %v692
    %v694 = vpop.f32.mrf.mxu0
    %695 = vmatprep.mubr.f32.mxu0 0.0
    %696 = vmatmul.mubr.f32.gmra.mxu0 %v618
    %v697 = vpop.f32.mrf.mxu0
    %v698 = vadd.f32 %v601, %v697
    %v699 = vpop.f32.mrf.mxu0
    %700 = vmatprep.mubr.f32.mxu0 0.0
    %701 = vmatmul.mubr.f32.gmra.mxu0 %v621
    %v702 = vpop.f32.mrf.mxu0
    %v703 = vadd.f32 %v606, %v702
    %v704 = vpop.f32.mrf.mxu0
    %705 = vmatprep.mubr.f32.mxu0 0.0
    %706 = vmatmul.mubr.f32.gmra.mxu0 %v624
    %v707 = vpop.f32.mrf.mxu0
    %v708 = vadd.f32 %v611, %v707
    %v709 = vpop.f32.mrf.mxu0
    %710 = vdwg.mxu0
    %v711 = vmax.f32 %v693, 0.0
    %v712 = vmax.f32 %v698, 0.0
    %v713 = vmax.f32 %v703, 0.0
    %v714 = vmax.f32 %v708, 0.0
    %v715 = vld [vmem:[%s7] sm:$0xff]
    %v716 = vld [vmem:[%s7 + $0x8] sm:$0xff]
    %v717 = vld [vmem:[%s8] sm:$0xff]
    %v718 = vld [vmem:[%s8 + $0x8] sm:$0xff]
    %720 = vset.pattern.permute.xlu0 0
    %721 = vperm.xlu0 %720, %v717
    %v722 = vpop.permute.xlu0 %721
    %725 = vset.pattern.permute.xlu0 0
    %726 = vperm.xlu0 %725, %v718
    %v727 = vpop.permute.xlu0 %726
    %vm729 = vcmask 261120
    %v731 = vsel %vm729, %v715, 0
    %v734 = vsel %vm729, %v716, 0
    %736 = vmatprep.subr.mxu0 0.0
    %737 = vmatpush1.msra.mxu0 0.0
    %738 = vmatprep.subr.mxu0 0.0
    %739 = vmatpush1.msra.mxu0 0.0
    %740 = vmatprep.subr.mxu0 0.0
    %741 = vmatpush1.msra.mxu0 0.0
    %742 = vmatprep.subr.mxu0 0.0
    %743 = vmatpush1.msra.mxu0 0.0
    %744 = vmatprep.subr.mxu0 0.0
    %745 = vmatpush1.msra.mxu0 0.0
    %746 = vmatprep.subr.mxu0 0.0
    %747 = vmatpush1.msra.mxu0 0.0
    %748 = vmatprep.subr.mxu0 0.0
    %749 = vmatpush1.msra.mxu0 0.0
    %750 = vmatprep.subr.mxu0 0.0
    %751 = vmatpush1.msra.mxu0 0.0
    %752 = vmatprep.subr.mxu0 0.0
    %753 = vmatpush1.msra.mxu0 0.0
    %754 = vmatprep.subr.mxu0 0.0
    %755 = vmatpush1.msra.mxu0 0.0
    %756 = vmatprep.subr.mxu0 0.0
    %757 = vmatpush1.msra.mxu0 0.0
    %758 = vmatprep.subr.mxu0 0.0
    %759 = vmatpush1.msra.mxu0 0.0
    %760 = vmatprep.subr.mxu0 0.0
    %761 = vmatpush1.msra.mxu0 %v714
    %762 = vmatprep.subr.mxu0 0.0
    %763 = vmatpush1.msra.mxu0 %v713
    %764 = vmatprep.subr.mxu0 0.0
    %765 = vmatpush1.msra.mxu0 %v712
    %766 = vmatprep.subr.mxu0 0.0
    %767 = vmatpush1.msra.mxu0 %v711
    %768 = vmatprep.subr.mxu0 0.0
    %769 = vmatpush2.msra.mxu0 0.0
    %770 = vmatprep.subr.mxu0 0.0
    %771 = vmatpush2.msra.mxu0 0.0
    %772 = vmatprep.subr.mxu0 0.0
    %773 = vmatpush2.msra.mxu0 0.0
    %774 = vmatprep.subr.mxu0 0.0
    %775 = vmatpush2.msra.mxu0 0.0
    %776 = vmatprep.subr.mxu0 0.0
    %777 = vmatpush2.msra.mxu0 0.0
    %778 = vmatprep.subr.mxu0 0.0
    %779 = vmatpush2.msra.mxu0 0.0
    %780 = vmatprep.subr.mxu0 0.0
    %781 = vmatpush2.msra.mxu0 0.0
    %782 = vmatprep.subr.mxu0 0.0
    %783 = vmatpush2.msra.mxu0 0.0
    %784 = vmatprep.subr.mxu0 0.0
    %785 = vmatpush2.msra.mxu0 0.0
    %786 = vmatprep.subr.mxu0 0.0
    %787 = vmatpush2.msra.mxu0 0.0
    %788 = vmatprep.subr.mxu0 0.0
    %789 = vmatpush2.msra.mxu0 0.0
    %790 = vmatprep.subr.mxu0 0.0
    %791 = vmatpush2.msra.mxu0 0.0
    %792 = vmatprep.subr.mxu0 0.0
    %793 = vmatpush2.msra.mxu0 0.0
    %794 = vmatprep.subr.mxu0 0.0
    %795 = vmatpush2.msra.mxu0 0.0
    %796 = vmatprep.subr.mxu0 0.0
    %797 = vmatpush2.msra.mxu0 0.0
    %798 = vmatprep.subr.mxu0 0.0
    %799 = vmatpush2.msra.mxu0 0.0
    %800 = vmatprep.mubr.f32.mxu0 0.0
    %801 = vmatmul.mubr.f32.gmra.mxu0 %v731
    %v802 = vpop.f32.mrf.mxu0
    %v803 = vadd.f32 %v722, %v802
    %v804 = vpop.f32.mrf.mxu0
    %805 = vmatprep.mubr.f32.mxu0 0.0
    %806 = vmatmul.mubr.f32.gmra.mxu0 %v734
    %v807 = vpop.f32.mrf.mxu0
    %v808 = vadd.f32 %v727, %v807
    %v809 = vpop.f32.mrf.mxu0
    %810 = vdwg.mxu0
    %v811 = vmax.f32 %v803, 0.0
    %v812 = vmax.f32 %v808, 0.0
    %v813 = vld [vmem:[%s9] sm:$0xff]
    %v814 = vld [vmem:[%s10] sm:$0xff]
    %816 = vset.pattern.permute.xlu0 0
    %817 = vperm.xlu0 %816, %v814
    %v818 = vpop.permute.xlu0 %817
    %vm820 = vcmask 130048
    %v822 = vsel %vm820, %v813, 0
    %824 = vmatprep.subr.mxu0 0.0
    %825 = vmatpush1.msra.mxu0 0.0
    %826 = vmatprep.subr.mxu0 0.0
    %827 = vmatpush1.msra.mxu0 0.0
    %828 = vmatprep.subr.mxu0 0.0
    %829 = vmatpush1.msra.mxu0 0.0
    %830 = vmatprep.subr.mxu0 0.0
    %831 = vmatpush1.msra.mxu0 0.0
    %832 = vmatprep.subr.mxu0 0.0
    %833 = vmatpush1.msra.mxu0 0.0
    %834 = vmatprep.subr.mxu0 0.0
    %835 = vmatpush1.msra.mxu0 0.0
    %836 = vmatprep.subr.mxu0 0.0
    %837 = vmatpush1.msra.mxu0 0.0
    %838 = vmatprep.subr.mxu0 0.0
    %839 = vmatpush1.msra.mxu0 0.0
    %840 = vmatprep.subr.mxu0 0.0
    %841 = vmatpush1.msra.mxu0 0.0
    %842 = vmatprep.subr.mxu0 0.0
    %843 = vmatpush1.msra.mxu0 0.0
    %844 = vmatprep.subr.mxu0 0.0
    %845 = vmatpush1.msra.mxu0 0.0
    %846 = vmatprep.subr.mxu0 0.0
    %847 = vmatpush1.msra.mxu0 0.0
    %848 = vmatprep.subr.mxu0 0.0
    %849 = vmatpush1.msra.mxu0 0.0
    %850 = vmatprep.subr.mxu0 0.0
    %851 = vmatpush1.msra.mxu0 0.0
    %852 = vmatprep.subr.mxu0 0.0
    %853 = vmatpush1.msra.mxu0 %v812
    %854 = vmatprep.subr.mxu0 0.0
    %855 = vmatpush1.msra.mxu0 %v811
    %856 = vmatprep.subr.mxu0 0.0
    %857 = vmatpush2.msra.mxu0 0.0
    %858 = vmatprep.subr.mxu0 0.0
    %859 = vmatpush2.msra.mxu0 0.0
    %860 = vmatprep.subr.mxu0 0.0
    %861 = vmatpush2.msra.mxu0 0.0
    %862 = vmatprep.subr.mxu0 0.0
    %863 = vmatpush2.msra.mxu0 0.0
    %864 = vmatprep.subr.mxu0 0.0
    %865 = vmatpush2.msra.mxu0 0.0
    %866 = vmatprep.subr.mxu0 0.0
    %867 = vmatpush2.msra.mxu0 0.0
    %868 = vmatprep.subr.mxu0 0.0
    %869 = vmatpush2.msra.mxu0 0.0
    %870 = vmatprep.subr.mxu0 0.0
    %871 = vmatpush2.msra.mxu0 0.0
    %872 = vmatprep.subr.mxu0 0.0
    %873 = vmatpush2.msra.mxu0 0.0
    %874 = vmatprep.subr.mxu0 0.0
    %875 = vmatpush2.msra.mxu0 0.0
    %876 = vmatprep.subr.mxu0 0.0
    %877 = vmatpush2.msra.mxu0 0.0
    %878 = vmatprep.subr.mxu0 0.0
    %879 = vmatpush2.msra.mxu0 0.0
    %880 = vmatprep.subr.mxu0 0.0
    %881 = vmatpush2.msra.mxu0 0.0
    %882 = vmatprep.subr.mxu0 0.0
    %883 = vmatpush2.msra.mxu0 0.0
    %884 = vmatprep.subr.mxu0 0.0
    %885 = vmatpush2.msra.mxu0 0.0
    %886 = vmatprep.subr.mxu0 0.0
    %887 = vmatpush2.msra.mxu0 0.0
    %888 = vmatprep.mubr.f32.mxu0 0.0
    %889 = vmatmul.mubr.f32.gmra.mxu0 %v822
    %v890 = vpop.f32.mrf.mxu0
    %v891 = vadd.f32 %v818, %v890
    %v892 = vpop.f32.mrf.mxu0
    %893 = vdwg.mxu0
    %v894 = vmax.f32 %v891, 0.0
    %v895 = vld [vmem:[%s11] sm:$0xff]
    %897 = vset.pattern.permute.xlu0 0
    %898 = vperm.xlu0 %897, %v895
    %v899 = vpop.permute.xlu0 %898
    %v901 = vmul.f32 %v894, %v899
    %v902 = vrot.slane %v901, 4
    %v903 = vadd.f32 %v901, %v902
    %v904 = vrot.slane %v903, 2
    %v905 = vadd.f32 %v903, %v904
    %v906 = vrot.slane %v905, 1
    %v907 = vadd.f32 %v905, %v906
    %v908 = vld [vmem:[#allocation2] sm:$0x1]
    %910 = vset.pattern.permute.xlu0 0
    %911 = vperm.xlu0 %910, %v908
    %v912 = vpop.permute.xlu0 %911
    %v914 = vlaneseq
    %v915 = vshrl.u32 %v914, 7
    %v916 = vsub.s32 0, %v915
    %v917 = vrot.slane %v912, %v916
    %v918 = vadd.f32 %v907, %v917
    %919 = vst [vmem:[#allocation3] sm:$0x1] %v918
    // Predicated region
    $region54: #{tpu_custom_call.1} parent=1 // pred_check
      _
    $region55: #{tpu_custom_call.1} parent=1 // pred_check_branch
      %921 = sbr.rel (0) target = $region57
    $region56: #{tpu_custom_call.1} parent=1 // pred_region
      %s923 = ssub.s32 16, 16
      %924 = vsyncadd [#allocation4], %s923
      %s926 = sshll.u32 [#allocation3], 4
      %s927 = int_to_ptr.vmem [resolvable:$true] %s926
      %929 = dma.vmem_to_hbm [thread:$0]  %s927, 16, %s13, [#allocation4]
    $region57: #{tpu_custom_call.1} parent=1 // pred_fallthru
      _
    // Predicated region
    $region58: #{tpu_custom_call.1} parent=1 // pred_check
      _
    $region59: #{tpu_custom_call.1} parent=1 // pred_check_branch
      %931 = sbr.rel (0) target = $region61
    $region60: #{tpu_custom_call.1} parent=1 // pred_region
      %932 = dma.done [#allocation4], 16
    $region61: #{tpu_custom_call.1} parent=1 // pred_fallthru
      _
    %933 = vsyncpa [#allocation4], 1

</llo_original>
